<compile_context>
chip_gen: v7x
topology: tpu7x:2x2x1
jax: 0.10.0
libtpu: 0.0.40
codegen_flags: <defaults>
</compile_context>

<pallas_src>
import functools

import jax
import jax.numpy as jnp
from jax import lax
from jax.experimental import pallas as pl
from jax.experimental.pallas import tpu as pltpu


# ----------------------------- kernels ----------------------------------------


def _pe_add_kernel(pe_ref, x_ref, o_ref):
    # pe_ref: (TILE_L, 1) f32 positional values for this sequence tile.
    # x_ref / o_ref: (1, TILE_L, TILE_D) tile of the input / output.
    x = x_ref[...].astype(jnp.float32)      # (1, TL, TD)
    pe = pe_ref[...]                        # (TL, 1) -> lane-broadcasts over TD
    o_ref[...] = (x + pe).astype(o_ref.dtype)


def _pe_only_kernel(o_ref, *, max_len):
    # o_ref: (1, L) with the sequence on the lane axis (lane-dense stores);
    # the (1, L, 1) output shape is restored by a free reshape in the wrapper.
    pos = lax.broadcasted_iota(jnp.float32, o_ref.shape, 1)
    o_ref[...] = jnp.sin(pos / jnp.float32(max_len)).astype(o_ref.dtype)


# ----------------------------- helpers -----------------------------------------


def _pick_tile(dim, target, align):
    """Largest multiple of `align` <= `target` that evenly divides `dim`,
    falling back to the full dimension (always a legal block extent)."""
    if dim <= target:
        return dim
    t = (target // align) * align
    while t >= align:
        if dim % t == 0:
            return t
        t -= align
    return dim


# ----------------------------- wrapper -----------------------------------------


def my_positional_embedding_wo_ch(x, *, max_len=5000, add=False):
    """Pallas equivalent of MyPositionalEmbedding_wo_ch.forward.

    x: (B, L, D) float array.
    Returns:
      add=True  -> (B, L, D) : x + sin(arange(L)/max_len)[None, :, None]
      add=False -> (1, L, 1) : sin(arange(L)/max_len)[None, :, None]  (f32)
    """
    B, L, D = x.shape

    if not add:
        # Only the sliced buffer is needed; compute it with a tiny lane-dense
        # kernel (sequence on the lane axis) and reshape outside.
        out = pl.pallas_call(
            functools.partial(_pe_only_kernel, max_len=max_len),
            out_shape=jax.ShapeDtypeStruct((1, L), jnp.float32),
        )()
        return out.reshape(1, L, 1)

    # ----- add=True: streamed elementwise add at HBM bandwidth ------------------
    # The module's registered buffer (sliced to length L), built once here.
    pe = jnp.sin(jnp.arange(L, dtype=jnp.float32) / jnp.float32(max_len))
    pe = pe.reshape(L, 1)

    tile_l = _pick_tile(L, 512, 8)      # sublane axis: multiple of 8 (or full L)
    tile_d = _pick_tile(D, 1024, 128)   # lane axis:    multiple of 128 (or full D)
    grid = (B, L // tile_l, D // tile_d)

    itemsize = jnp.dtype(x.dtype).itemsize
    cost = pl.CostEstimate(
        flops=B * L * D,
        transcendentals=0,
        bytes_accessed=2 * B * L * D * itemsize + L * 4,
    )

    return pl.pallas_call(
        _pe_add_kernel,
        out_shape=jax.ShapeDtypeStruct((B, L, D), x.dtype),
        grid_spec=pltpu.PrefetchScalarGridSpec(
            num_scalar_prefetch=0,
            grid=grid,
            in_specs=[
                # pe tile depends only on the sequence-tile index; tiny DMA,
                # re-used across the whole hidden-dim sweep.
                pl.BlockSpec((tile_l, 1), lambda b, l, d: (l, 0)),
                pl.BlockSpec((1, tile_l, tile_d), lambda b, l, d: (b, l, d)),
            ],
            out_specs=pl.BlockSpec((1, tile_l, tile_d), lambda b, l, d: (b, l, d)),
        ),
        compiler_params=pltpu.CompilerParams(
            dimension_semantics=("parallel", "parallel", "parallel"),
        ),
        cost_estimate=cost,
    )(pe, x)


# ------------------------------ main --------------------------------------------

if __name__ == "__main__":
    key = jax.random.PRNGKey(0)
    B, L, D = 2, 8, 32
    max_len = 5000

    x = jax.random.normal(key, (B, L, D), dtype=jnp.float32)

    # Reference (plain JAX, mirrors the PyTorch buffer construction).
    pe_full = jnp.sin(jnp.arange(max_len, dtype=jnp.float32) / max_len)
    pe_full = pe_full[None, :, None]                  # (1, max_len, 1)
    ref_add = x + pe_full[:, :L]                      # (B, L, D)
    ref_pe = pe_full[:, :L]                           # (1, L, 1)

    # add=True path
    out_add = jax.block_until_ready(
        my_positional_embedding_wo_ch(x, max_len=max_len, add=True))
    assert out_add.shape == (B, L, D)
    assert jnp.allclose(out_add, ref_add, atol=1e-6), "add=True mismatch"

    # add=False path
    out_pe = jax.block_until_ready(
        my_positional_embedding_wo_ch(x, max_len=max_len, add=False))
    assert out_pe.shape == (1, L, 1)
    assert jnp.allclose(out_pe, ref_pe, atol=1e-6), "add=False mismatch"

    print("KERNEL_OK")
</pallas_src>

<mosaic_0001>
module attributes {stable_mosaic.version = 11 : i64} {
  func.func @_pe_add_kernel(%arg0: i32, %arg1: i32, %arg2: i32, %arg3: memref<8x1xf32, #tpu.memory_space<vmem>>, %arg4: memref<1x8x32xf32, #tpu.memory_space<vmem>>, %arg5: memref<1x8x32xf32, #tpu.memory_space<vmem>>) attributes {dimension_semantics = [#tpu.dimension_semantics<parallel>, #tpu.dimension_semantics<parallel>, #tpu.dimension_semantics<parallel>], iteration_bounds = array<i64: 2, 1, 1>, scalar_prefetch = 0 : i64, scratch_operands = 0 : i64, tpu.core_type = #tpu.core_type<tc>, window_params = [{transform_indices = @transform_0, window_bounds = array<i64: 8, 1>}, {transform_indices = @transform_1, window_bounds = array<i64: 1, 8, 32>}, {transform_indices = @transform_2, window_bounds = array<i64: 1, 8, 32>}]} {
    %c0 = arith.constant 0 : index
    %c0_0 = arith.constant 0 : index
    %c0_1 = arith.constant 0 : index
    %0 = vector.load %arg4[%c0, %c0_0, %c0_1] : memref<1x8x32xf32, #tpu.memory_space<vmem>>, vector<1x8x32xf32>
    %c0_2 = arith.constant 0 : index
    %c0_3 = arith.constant 0 : index
    %1 = vector.load %arg3[%c0_2, %c0_3] : memref<8x1xf32, #tpu.memory_space<vmem>>, vector<8x1xf32>
    %2 = vector.shape_cast %1 : vector<8x1xf32> to vector<1x8x1xf32>
    %3 = vector.broadcast %2 : vector<1x8x1xf32> to vector<1x8x32xf32>
    %4 = arith.addf %0, %3 : vector<1x8x32xf32>
    %c0_4 = arith.constant 0 : index
    %c0_5 = arith.constant 0 : index
    %c0_6 = arith.constant 0 : index
    %5 = vector.load %arg5[%c0_4, %c0_5, %c0_6] : memref<1x8x32xf32, #tpu.memory_space<vmem>>, vector<1x8x32xf32>
    tpu.vector_store %arg5[%c0_4, %c0_5, %c0_6], %4 {strides = array<i32>} : memref<1x8x32xf32, #tpu.memory_space<vmem>>, vector<1x8x32xf32>,
    return
  }
  func.func @transform_0(%arg0: i32, %arg1: i32, %arg2: i32) -> (i32, i32) {
    %c0_i32 = arith.constant 0 : i32
    %c0_i32_0 = arith.constant 0 : i32
    return %arg1, %c0_i32 : i32, i32
  }
  func.func @transform_1(%arg0: i32, %arg1: i32, %arg2: i32) -> (i32, i32, i32) {
    %c0_i32 = arith.constant 0 : i32
    return %arg0, %arg1, %arg2 : i32, i32, i32
  }
  func.func @transform_2(%arg0: i32, %arg1: i32, %arg2: i32) -> (i32, i32, i32) {
    %c0_i32 = arith.constant 0 : i32
    return %arg0, %arg1, %arg2 : i32, i32, i32
  }
}

</mosaic_0001>

<llo_original>
// kernel: tpu_custom_call.1
$region0: #{tpu_custom_call.1}
  #allocation0 [shape = 'u32[]', space=smem, size = 0x4, offset = 0x4, fixed_abs, tag = 'smem constant byte address 0x4 - core index']
  #allocation1 [shape = 'u32[144,128]{1,0:T(1,128)}', space=vmem, size = 0x12000, scoped, tag = 'internal scratch']
  %s0 = inlined_call_operand.vmem [shape: f32[8,1], index: 0, kind: input, shape index: {}]
  %s1 = inlined_call_operand.hbm [shape: f32[2,8,32], index: 1, kind: input, shape index: {}]
  %s2 = inlined_call_operand.hbm [shape: f32[2,8,32], index: 2, kind: output, shape index: {}]
  %s3 = sld [smem:[#allocation0]]
  $region45: #{tpu_custom_call.1} parent=0
    _
  %s5 = ssub.s32 1, %s3
  %s6 = scalar_select 0, %s5, %s3
  $region1: #{tpu_custom_call.1} parent=0
    #allocation2 [shape = 'u8[8192]{0}', space=vmem, size = 0x2000, scoped, tag = 'input window, operand 1']
    #allocation3 [shape = 's32[2]{0}', space=sflag, size = 0x8, scoped, tag = 'scoped memory for tpu_custom_call.1']
    #allocation4 [shape = 's32[2]{0}', space=sflag, size = 0x8, scoped, tag = 'scoped memory for tpu_custom_call.1']
    #allocation5 [shape = 'u8[8192]{0}', space=vmem, size = 0x2000, scoped, tag = 'output window, operand 0']
    %7 = vsyncpa [#allocation3], 0
    %s8 = scalar_lea.sflag [#allocation3], 1
    %9 = vsyncpa %s8, 0
    %10 = vsyncpa [#allocation4], 0
    %s11 = scalar_lea.sflag [#allocation4], 1
    %12 = vsyncpa %s11, 0
    loop: start=0, step=1, limit=4
    $region2: #{tpu_custom_call.1} parent=1 // loop_pre_header
      _
    $region3: #{tpu_custom_call.1} parent=1 // loop_header
      %s14 = sphi 0, %s18
      %p15 = scmp.ge.s32.totalorder %s14, 4
      %s21 = sphi 0, %s40
      %s22 = sphi 0, %s36
      %s23 = sphi 0, %s32
      %s24 = sphi 0, %s21
      %s25 = sphi 0, %s22
      %s26 = sphi 0, %s23
      %s27 = sphi 0, %s24
      %s28 = sphi 0, %s25
      %s29 = sphi 0, %s26
      %s43 = sphi 0, %s45
      %s46 = sphi 0, %s43
      %s47 = sphi 0, %s46
      %s63 = sphi 0, %s47
      %s73 = sphi 0, %s75
      %s76 = sphi 0, %s73
      %s77 = sphi 0, %s76
      %s93 = sphi 0, %s77
      %s103 = sphi 0, %s105
      %s106 = sphi 0, %s103
      %s107 = sphi 0, %s106
      %s123 = sphi 0, %s107
    $region4: #{tpu_custom_call.1} parent=1 // loop_header_branch
      %17 = sbr.rel (%p15) target = $region8
    $region5: #{tpu_custom_call.1} parent=1 // loop_body
      %s19 = ssub.s32 %s14, 1
      %s20 = ssub.s32 %s14, 2
      %s30 = sadd.s32 1, %s23
      %p31 = scmp.ge.s32.totalorder %s30, 1
      %s32 = scalar_select %p31, 0, %s30
      %s33 = sadd.s32 1, %s22
      %s34 = scalar_select %p31, %s33, %s22
      %p35 = scmp.ge.s32.totalorder %s34, 1
      %s36 = scalar_select %p35, 0, %s34
      %s37 = sadd.s32 1, %s21
      %s38 = scalar_select %p35, %s37, %s21
      %p39 = scmp.ge.s32.totalorder %s38, 2
      %s40 = scalar_select %p39, 0, %s38
      %s41 = ssub.s32 %s22, %s36
      %p42 = scmp.eq.s32.totalorder %s41, 0
      %s44 = sadd.s32 %s43, 1
      %s45 = scalar_select %p42, %s43, %s44
      %p48 = pneg %p42
      %p49 = scmp.eq.s32.totalorder %s14, 1
      %p50 = por %p48, %p49
      %p51 = scmp.ne.s32.totalorder %s43, %s46
      %p52 = scmp.eq.s32.totalorder %s14, 0
      %p53 = por %p51, %p52
      %p54 = scmp.ne.s32.totalorder %s43, %s46
      %p55 = scmp.eq.s32.totalorder %s19, 1
      %p56 = por %p54, %p55
      %p57 = scmp.ne.s32.totalorder %s46, %s47
      %p58 = scmp.eq.s32.totalorder %s19, 0
      %p59 = por %p57, %p58
      %p60 = scmp.ne.s32.totalorder %s46, %s47
      %p61 = scmp.eq.s32.totalorder %s20, 1
      %p62 = por %p60, %p61
      %p64 = scmp.ne.s32.totalorder %s47, %s63
      %p65 = scmp.eq.s32.totalorder %s20, 0
      %p66 = por %p64, %p65
      %s67 = ssub.s32 %s21, %s40
      %s68 = ssub.s32 %s22, %s36
      %s69 = sor.u32 %s67, %s68
      %s70 = ssub.s32 %s23, %s32
      %s71 = sor.u32 %s69, %s70
      %p72 = scmp.eq.s32.totalorder %s71, 0
      %s74 = sadd.s32 %s73, 1
      %s75 = scalar_select %p72, %s73, %s74
      %p78 = pneg %p72
      %p79 = scmp.eq.s32.totalorder %s14, 1
      %p80 = por %p78, %p79
      %p81 = scmp.ne.s32.totalorder %s73, %s76
      %p82 = scmp.eq.s32.totalorder %s14, 0
      %p83 = por %p81, %p82
      %p84 = scmp.ne.s32.totalorder %s73, %s76
      %p85 = scmp.eq.s32.totalorder %s19, 1
      %p86 = por %p84, %p85
      %p87 = scmp.ne.s32.totalorder %s76, %s77
      %p88 = scmp.eq.s32.totalorder %s19, 0
      %p89 = por %p87, %p88
      %p90 = scmp.ne.s32.totalorder %s76, %s77
      %p91 = scmp.eq.s32.totalorder %s20, 1
      %p92 = por %p90, %p91
      %p94 = scmp.ne.s32.totalorder %s77, %s93
      %p95 = scmp.eq.s32.totalorder %s20, 0
      %p96 = por %p94, %p95
      %s97 = ssub.s32 %s21, %s40
      %s98 = ssub.s32 %s22, %s36
      %s99 = sor.u32 %s97, %s98
      %s100 = ssub.s32 %s23, %s32
      %s101 = sor.u32 %s99, %s100
      %p102 = scmp.eq.s32.totalorder %s101, 0
      %s104 = sadd.s32 %s103, 1
      %s105 = scalar_select %p102, %s103, %s104
      %p108 = pneg %p102
      %p109 = scmp.eq.s32.totalorder %s14, 1
      %p110 = por %p108, %p109
      %p111 = scmp.ne.s32.totalorder %s103, %s106
      %p112 = scmp.eq.s32.totalorder %s14, 0
      %p113 = por %p111, %p112
      %p114 = scmp.ne.s32.totalorder %s103, %s106
      %p115 = scmp.eq.s32.totalorder %s19, 1
      %p116 = por %p114, %p115
      %p117 = scmp.ne.s32.totalorder %s106, %s107
      %p118 = scmp.eq.s32.totalorder %s19, 0
      %p119 = por %p117, %p118
      %p120 = scmp.ne.s32.totalorder %s106, %s107
      %p121 = scmp.eq.s32.totalorder %s20, 1
      %p122 = por %p120, %p121
      %p124 = scmp.ne.s32.totalorder %s107, %s123
      %p125 = scmp.eq.s32.totalorder %s20, 0
      %p126 = por %p124, %p125
      %p127 = scmp.le.s32.totalorder 1, %s14
      %p128 = scmp.lt.s32.totalorder %s14, 3
      %p129 = pnand %p127, %p128
      %p130 = pneg %p129
      // Predicated region
      $region9: #{tpu_custom_call.1} parent=5 // pred_check
        _
      $region10: #{tpu_custom_call.1} parent=5 // pred_check_branch
        %132 = sbr.rel (%p129) target = $region12
      $region11: #{tpu_custom_call.1} parent=5 // pred_region
        %s133 = ssub.s32 %s14, 1
        // Predicated region
        $region13: #{tpu_custom_call.1} parent=11 // pred_check
          %p134 = pneg %p59
        $region14: #{tpu_custom_call.1} parent=11 // pred_check_branch
          %136 = sbr.rel (%p134) target = $region16
        $region15: #{tpu_custom_call.1} parent=11 // pred_region
          %p137 = scmp.lt.s32.totalorder %s25, 0
          %s138 = scalar_select %p137, %s25, 0
          %s139 = smul.addr %s138, 8
          %s140 = scalar_lea.vmem %s0, %s139
        $region16: #{tpu_custom_call.1} parent=11 // pred_fallthru
          _
      $region12: #{tpu_custom_call.1} parent=5 // pred_fallthru
        _
      %p141 = scmp.lt.s32.totalorder %s14, 2
      // Predicated region
      $region17: #{tpu_custom_call.1} parent=5 // pred_check
        %p142 = pneg %p141
      $region18: #{tpu_custom_call.1} parent=5 // pred_check_branch
        %144 = sbr.rel (%p142) target = $region20
      $region19: #{tpu_custom_call.1} parent=5 // pred_region
        // Predicated region
        $region21: #{tpu_custom_call.1} parent=19 // pred_check
          %p145 = pneg %p83
        $region22: #{tpu_custom_call.1} parent=19 // pred_check_branch
          %147 = sbr.rel (%p145) target = $region24
        $region23: #{tpu_custom_call.1} parent=19 // pred_region
          %s148 = sand.u32 %s73, 1
          %s149 = scalar_lea.sflag [#allocation3], %s148
          %s150 = sand.u32 %s73, 1
          %s151 = smul.addr %s150, 8
          %s152 = scalar_lea.vmem [#allocation2], %s151
          %s154 = ssub.s32 128, 128
          %155 = vsyncadd %s149, %s154
          %s156 = sadd.s32 %s23, %s22
          %s157 = sadd.s32 %s156, %s21
          %s158 = smul.addr %s157, 128
          %s159 = scalar_lea.hbm %s1, %s158
          %s161 = sshll.u32 %s152, 4
          %s162 = int_to_ptr.vmem [resolvable:$true] %s161
          %164 = dma.hbm_to_vmem [thread:$0]  %s159, 128, %s162, %s149
        $region24: #{tpu_custom_call.1} parent=19 // pred_fallthru
          _
      $region20: #{tpu_custom_call.1} parent=5 // pred_fallthru
        _
      %p165 = scmp.le.s32.totalorder 1, %s14
      %p166 = scmp.lt.s32.totalorder %s14, 3
      %p167 = pnand %p165, %p166
      %p168 = pneg %p167
      // Predicated region
      $region25: #{tpu_custom_call.1} parent=5 // pred_check
        _
      $region26: #{tpu_custom_call.1} parent=5 // pred_check_branch
        %170 = sbr.rel (%p167) target = $region28
      $region27: #{tpu_custom_call.1} parent=5 // pred_region
        %s171 = ssub.s32 %s14, 1
        %s172 = sand.u32 %s76, 1
        %s173 = scalar_lea.sflag [#allocation3], %s172
        %s174 = sand.u32 %s76, 1
        %s175 = smul.addr %s174, 8
        %s176 = scalar_lea.vmem [#allocation2], %s175
        // Predicated region
        $region29: #{tpu_custom_call.1} parent=27 // pred_check
          %p177 = pneg %p89
        $region30: #{tpu_custom_call.1} parent=27 // pred_check_branch
          %179 = sbr.rel (%p177) target = $region32
        $region31: #{tpu_custom_call.1} parent=27 // pred_region
          %180 = dma.done %s173, 128
        $region32: #{tpu_custom_call.1} parent=27 // pred_fallthru
          _
        %p181 = scmp.lt.s32.totalorder %s25, 0
        %s182 = scalar_select %p181, %s25, 0
        %s183 = smul.addr %s182, 8
        %s184 = scalar_lea.vmem %s0, %s183
        %p185 = pneg %p59
        %p186 = pneg %p56
        %s187 = sand.u32 %s76, 1
        %s188 = scalar_lea.sflag [#allocation3], %s187
        %s189 = sand.u32 %s76, 1
        %s190 = smul.addr %s189, 8
        %s191 = scalar_lea.vmem [#allocation2], %s190
        %p192 = pneg %p89
        %p193 = pneg %p86
        %p194 = pneg %p119
        %p195 = pneg %p116
        %s196 = sand.u32 %s106, 1
        %s197 = scalar_lea.sflag [#allocation4], %s196
        %s198 = sand.u32 %s106, 1
        %s199 = smul.addr %s198, 8
        %s200 = scalar_lea.vmem [#allocation5], %s199
        %p201 = scmp.lt.s32.totalorder %s25, 0
        %s202 = scalar_select %p201, %s25, 0
        %s203 = smul.addr %s202, 8
        %s204 = scalar_lea.vmem %s0, %s203
        %v205 = vld [vmem:[%s176] sm:$0xff]
        %v206 = vld [vmem:[%s204] sm:$0xff]
        %208 = vset.pattern.permute.xlu0 0
        %209 = vperm.xlu0 %208, %v206
        %v210 = vpop.permute.xlu0 %209
        %v212 = vadd.f32 %v205, %v210
        %vm213 = vcmask 261120
        %214 = vst.msk [vmem:[%s200] sm:$0xff] %vm213, %v212
        %s215 = sand.u32 %s106, 1
        %s216 = scalar_lea.sflag [#allocation4], %s215
        %s217 = sand.u32 %s106, 1
        %s218 = smul.addr %s217, 8
        %s219 = scalar_lea.vmem [#allocation5], %s218
        // Predicated region
        $region33: #{tpu_custom_call.1} parent=27 // pred_check
          %p220 = pneg %p116
        $region34: #{tpu_custom_call.1} parent=27 // pred_check_branch
          %222 = sbr.rel (%p220) target = $region36
        $region35: #{tpu_custom_call.1} parent=27 // pred_region
          %s224 = ssub.s32 128, 128
          %225 = vsyncadd %s216, %s224
          %s226 = sadd.s32 %s26, %s25
          %s227 = sadd.s32 %s226, %s24
          %s228 = smul.addr %s227, 128
          %s229 = scalar_lea.hbm %s2, %s228
          %s231 = sshll.u32 %s219, 4
          %s232 = int_to_ptr.vmem [resolvable:$true] %s231
          %234 = dma.vmem_to_hbm [thread:$0]  %s232, 128, %s229, %s216
        $region36: #{tpu_custom_call.1} parent=27 // pred_fallthru
          _
      $region28: #{tpu_custom_call.1} parent=5 // pred_fallthru
        _
      %p235 = scmp.le.s32.totalorder 2, %s14
      // Predicated region
      $region37: #{tpu_custom_call.1} parent=5 // pred_check
        %p236 = pneg %p235
      $region38: #{tpu_custom_call.1} parent=5 // pred_check_branch
        %238 = sbr.rel (%p236) target = $region40
      $region39: #{tpu_custom_call.1} parent=5 // pred_region
        %s239 = ssub.s32 %s14, 2
        // Predicated region
        $region41: #{tpu_custom_call.1} parent=39 // pred_check
          %p240 = pneg %p122
        $region42: #{tpu_custom_call.1} parent=39 // pred_check_branch
          %242 = sbr.rel (%p240) target = $region44
        $region43: #{tpu_custom_call.1} parent=39 // pred_region
          %s243 = sand.u32 %s107, 1
          %s244 = scalar_lea.sflag [#allocation4], %s243
          %s245 = sand.u32 %s107, 1
          %s246 = smul.addr %s245, 8
          %s247 = scalar_lea.vmem [#allocation5], %s246
          %248 = dma.done %s244, 128
        $region44: #{tpu_custom_call.1} parent=39 // pred_fallthru
          _
      $region40: #{tpu_custom_call.1} parent=5 // pred_fallthru
        _
    $region6: #{tpu_custom_call.1} parent=1 // loop_footer
      %s18 = sadd.s32 1, %s14
    $region7: #{tpu_custom_call.1} parent=1 // loop_footer_branch
      %13 = sbr.rel target = $region3
    $region8: #{tpu_custom_call.1} parent=1 // loop_exit
      _
    %249 = vsyncpa [#allocation3], 1
    %s250 = scalar_lea.sflag [#allocation3], 1
    %251 = vsyncpa %s250, 1
    %252 = vsyncpa [#allocation4], 1
    %s253 = scalar_lea.sflag [#allocation4], 1
    %254 = vsyncpa %s253, 1

</llo_original>
